<compile_context>
chip_gen: v5e
topology: v5e:2x2
jax: 0.10.0
libtpu: 0.0.40
codegen_flags: <defaults>
</compile_context>

<pallas_src>
import functools

import numpy as np
import jax
import jax.numpy as jnp
from jax import lax
from jax.experimental import pallas as pl
from jax.experimental.pallas import tpu as pltpu


def _aliasing_kernel(x_ref, o_ref, *, factor):
    """x_ref, o_ref: (1, TH, TW) uint8 tiles of one channel plane."""
    f = factor
    off = f // 2
    inv_f = np.float32(1.0 / f)
    _, th, tw = x_ref.shape

    # uint8 -> int32 -> f32 -> bf16 (0..255 are exactly representable in bf16).
    x = x_ref[0].astype(jnp.int32).astype(jnp.float32).astype(jnp.bfloat16)

    # Row-selection one-hot matrix gh[y, k] = (k == f*(y//f) + f//2),
    # generated in-kernel (cheap VPU work; no HBM traffic, no VMEM buffers).
    y_i = lax.broadcasted_iota(jnp.int32, (th, th), 0).astype(jnp.float32)
    k_i = lax.broadcasted_iota(jnp.int32, (th, th), 1).astype(jnp.float32)
    tgt_h = jnp.floor((y_i + 0.5) * inv_f) * f + off      # == f*(y//f)+off, exact
    gh = jnp.where(k_i == tgt_h, 1.0, 0.0).astype(jnp.bfloat16)

    # Column-selection matrix, built already transposed: gwt[k, x] = (k == f*(x//f)+f//2).
    k_j = lax.broadcasted_iota(jnp.int32, (tw, tw), 0).astype(jnp.float32)
    x_j = lax.broadcasted_iota(jnp.int32, (tw, tw), 1).astype(jnp.float32)
    tgt_w = jnp.floor((x_j + 0.5) * inv_f) * f + off
    gwt = jnp.where(k_j == tgt_w, 1.0, 0.0).astype(jnp.bfloat16)

    # Row gather then column gather: out = GH @ X @ GW^T (two exact one-hot
    # selection matmuls on the MXU; bf16 inputs, f32 accumulation).
    tmp = jnp.dot(gh, x, preferred_element_type=jnp.float32)
    out = jnp.dot(tmp.astype(jnp.bfloat16), gwt, preferred_element_type=jnp.float32)

    # Values are exact integers in [0, 255]; write uint8 (lane-dense store).
    out = jnp.clip(jnp.round(out), 0.0, 255.0)
    o_ref[0] = out.astype(jnp.int32).astype(jnp.uint8)


def apply_aliasing(img, factor=4):
    """img: (N, 3, H, W) uint8 RGB (NCHW). Returns (N, 3, H, W) uint8 RGB."""
    N, C, H, W = img.shape
    # TODO(synk): PIL also handles H/W not divisible by `factor` (the nearest
    #             mapping is then not tile-local); only the divisible case is
    #             implemented here.
    assert H % factor == 0 and W % factor == 0, "H and W must be divisible by factor"

    # Lane-dense 128-wide tiles when possible (multiple of (8,128)/(32,128)
    # layouts and of `factor`); otherwise fall back to the full plane.
    TH = 128 if (H % 128 == 0 and 128 % factor == 0) else H
    TW = 128 if (W % 128 == 0 and 128 % factor == 0) else W

    x = img.reshape(N * C, H, W)          # free reshape; channels become grid steps
    grid = (N * C, H // TH, W // TW)

    out = pl.pallas_call(
        functools.partial(_aliasing_kernel, factor=factor),
        out_shape=jax.ShapeDtypeStruct((N * C, H, W), jnp.uint8),
        grid_spec=pltpu.PrefetchScalarGridSpec(
            num_scalar_prefetch=0,
            grid=grid,
            in_specs=[pl.BlockSpec((1, TH, TW), lambda nc, i, j: (nc, i, j))],
            out_specs=pl.BlockSpec((1, TH, TW), lambda nc, i, j: (nc, i, j)),
        ),
        compiler_params=pltpu.CompilerParams(
            dimension_semantics=("parallel", "parallel", "parallel")),
    )(x)
    return out.reshape(N, C, H, W)


if __name__ == "__main__":
    key = jax.random.PRNGKey(0)
    N, C, H, W, factor = 2, 3, 128, 128, 4   # lane-dense demo shape
    img = jax.random.randint(key, (N, C, H, W), 0, 256, dtype=jnp.int32)
    img = img.astype(jnp.uint8)

    out = apply_aliasing(img, factor=factor)
    out = jax.block_until_ready(out)

    assert out.shape == img.shape and out.dtype == jnp.uint8

    # Consistency check against the exact nearest-down + nearest-up index map.
    gy = (np.arange(H) // factor) * factor + factor // 2
    gx = (np.arange(W) // factor) * factor + factor // 2
    ref = np.asarray(img)[:, :, gy][:, :, :, gx]
    assert np.array_equal(np.asarray(out), ref)

    print("KERNEL_OK")
</pallas_src>

<mosaic_0001>
module attributes {stable_mosaic.version = 11 : i64} {
  func.func @_aliasing_kernel(%arg0: i32, %arg1: i32, %arg2: i32, %arg3: memref<1x128x128xi8, #tpu.memory_space<vmem>>, %arg4: memref<1x128x128xi8, #tpu.memory_space<vmem>>) attributes {dimension_semantics = [#tpu.dimension_semantics<parallel>, #tpu.dimension_semantics<parallel>, #tpu.dimension_semantics<parallel>], iteration_bounds = array<i64: 6, 1, 1>, scalar_prefetch = 0 : i64, scratch_operands = 0 : i64, tpu.core_type = #tpu.core_type<tc>, window_params = [{transform_indices = @transform_0, window_bounds = array<i64: 1, 128, 128>}, {transform_indices = @transform_1, window_bounds = array<i64: 1, 128, 128>}]} {
    %c0 = arith.constant 0 : index
    %c0_0 = arith.constant 0 : index
    %c0_1 = arith.constant 0 : index
    %0 = vector.load %arg3[%c0, %c0_0, %c0_1] : memref<1x128x128xi8, #tpu.memory_space<vmem>>, vector<1x128x128xi8>
    %1 = vector.shape_cast %0 : vector<1x128x128xi8> to vector<128x128xi8>
    %2 = arith.extui %1 : vector<128x128xi8> to vector<128x128xi32>
    %3 = arith.sitofp %2 : vector<128x128xi32> to vector<128x128xf32>
    %4 = arith.truncf %3 : vector<128x128xf32> to vector<128x128xbf16>
    %5 = tpu.iota {dimensions = array<i32: 0>} : vector<128x128xi32>
    %6 = arith.sitofp %5 : vector<128x128xi32> to vector<128x128xf32>
    %7 = tpu.iota {dimensions = array<i32: 1>} : vector<128x128xi32>
    %8 = arith.sitofp %7 : vector<128x128xi32> to vector<128x128xf32>
    %cst = arith.constant 5.000000e-01 : f32
    %9 = vector.broadcast %cst : f32 to vector<128x128xf32>
    %10 = arith.addf %6, %9 : vector<128x128xf32>
    %cst_2 = arith.constant 2.500000e-01 : f32
    %11 = vector.broadcast %cst_2 : f32 to vector<128x128xf32>
    %12 = arith.mulf %10, %11 : vector<128x128xf32>
    %13 = math.floor %12 : vector<128x128xf32>
    %cst_3 = arith.constant 4.000000e+00 : f32
    %14 = vector.broadcast %cst_3 : f32 to vector<128x128xf32>
    %15 = arith.mulf %13, %14 : vector<128x128xf32>
    %cst_4 = arith.constant 2.000000e+00 : f32
    %16 = vector.broadcast %cst_4 : f32 to vector<128x128xf32>
    %17 = arith.addf %15, %16 : vector<128x128xf32>
    %18 = arith.cmpf oeq, %8, %17 : vector<128x128xf32>
    %cst_5 = arith.constant 1.000000e+00 : f32
    %cst_6 = arith.constant 0.000000e+00 : f32
    %19 = vector.broadcast %cst_5 : f32 to vector<128x128xf32>
    %20 = vector.broadcast %cst_6 : f32 to vector<128x128xf32>
    %21 = arith.select %18, %19, %20 : vector<128x128xi1>, vector<128x128xf32>
    %22 = arith.truncf %21 : vector<128x128xf32> to vector<128x128xbf16>
    %23 = tpu.iota {dimensions = array<i32: 0>} : vector<128x128xi32>
    %24 = arith.sitofp %23 : vector<128x128xi32> to vector<128x128xf32>
    %25 = tpu.iota {dimensions = array<i32: 1>} : vector<128x128xi32>
    %26 = arith.sitofp %25 : vector<128x128xi32> to vector<128x128xf32>
    %cst_7 = arith.constant 5.000000e-01 : f32
    %27 = vector.broadcast %cst_7 : f32 to vector<128x128xf32>
    %28 = arith.addf %26, %27 : vector<128x128xf32>
    %cst_8 = arith.constant 2.500000e-01 : f32
    %29 = vector.broadcast %cst_8 : f32 to vector<128x128xf32>
    %30 = arith.mulf %28, %29 : vector<128x128xf32>
    %31 = math.floor %30 : vector<128x128xf32>
    %cst_9 = arith.constant 4.000000e+00 : f32
    %32 = vector.broadcast %cst_9 : f32 to vector<128x128xf32>
    %33 = arith.mulf %31, %32 : vector<128x128xf32>
    %cst_10 = arith.constant 2.000000e+00 : f32
    %34 = vector.broadcast %cst_10 : f32 to vector<128x128xf32>
    %35 = arith.addf %33, %34 : vector<128x128xf32>
    %36 = arith.cmpf oeq, %24, %35 : vector<128x128xf32>
    %cst_11 = arith.constant 1.000000e+00 : f32
    %cst_12 = arith.constant 0.000000e+00 : f32
    %37 = vector.broadcast %cst_11 : f32 to vector<128x128xf32>
    %38 = vector.broadcast %cst_12 : f32 to vector<128x128xf32>
    %39 = arith.select %36, %37, %38 : vector<128x128xi1>, vector<128x128xf32>
    %40 = arith.truncf %39 : vector<128x128xf32> to vector<128x128xbf16>
    %cst_13 = arith.constant dense<0.000000e+00> : vector<128x128xf32>
    %41 = tpu.matmul %22, %4, %cst_13 {dimension_numbers = #tpu.dot_dimension_numbers<[1], [0], [0], [1], [0, 0, 1, 1], [], []>} : vector<128x128xbf16>, vector<128x128xbf16>, vector<128x128xf32> -> vector<128x128xf32>
    %42 = arith.truncf %41 : vector<128x128xf32> to vector<128x128xbf16>
    %cst_14 = arith.constant dense<0.000000e+00> : vector<128x128xf32>
    %43 = tpu.matmul %42, %40, %cst_14 {dimension_numbers = #tpu.dot_dimension_numbers<[1], [0], [0], [1], [0, 0, 1, 1], [], []>} : vector<128x128xbf16>, vector<128x128xbf16>, vector<128x128xf32> -> vector<128x128xf32>
    %44 = math.roundeven %43 : vector<128x128xf32>
    %cst_15 = arith.constant 0.000000e+00 : f32
    %cst_16 = arith.constant 2.550000e+02 : f32
    %45 = vector.broadcast %cst_15 : f32 to vector<128x128xf32>
    %46 = arith.maximumf %45, %44 : vector<128x128xf32>
    %47 = vector.broadcast %cst_16 : f32 to vector<128x128xf32>
    %48 = arith.minimumf %47, %46 : vector<128x128xf32>
    %49 = arith.fptosi %48 : vector<128x128xf32> to vector<128x128xi32>
    %50 = arith.trunci %49 : vector<128x128xi32> to vector<128x128xi8>
    %c0_17 = arith.constant 0 : index
    %c0_18 = arith.constant 0 : index
    %c0_19 = arith.constant 0 : index
    %51 = vector.load %arg4[%c0_17, %c0_18, %c0_19] : memref<1x128x128xi8, #tpu.memory_space<vmem>>, vector<1x128x128xi8>
    %52 = vector.shape_cast %51 : vector<1x128x128xi8> to vector<128x128xi8>
    %53 = vector.shape_cast %50 : vector<128x128xi8> to vector<1x128x128xi8>
    tpu.vector_store %arg4[%c0_17, %c0_18, %c0_19], %53 {strides = array<i32>} : memref<1x128x128xi8, #tpu.memory_space<vmem>>, vector<1x128x128xi8>,
    return
  }
  func.func @transform_0(%arg0: i32, %arg1: i32, %arg2: i32) -> (i32, i32, i32) {
    %c0_i32 = arith.constant 0 : i32
    return %arg0, %arg1, %arg2 : i32, i32, i32
  }
  func.func @transform_1(%arg0: i32, %arg1: i32, %arg2: i32) -> (i32, i32, i32) {
    %c0_i32 = arith.constant 0 : i32
    return %arg0, %arg1, %arg2 : i32, i32, i32
  }
}

</mosaic_0001>

<llo_original>
// kernel: tpu_custom_call.1
$region0: #{tpu_custom_call.1}
  #allocation0 [shape = 'u32[]', space=smem, size = 0x4, offset = 0x4, fixed_abs, tag = 'smem constant byte address 0x4 - core index']
  #allocation1 [shape = 'u32[72,128]{1,0:T(1,128)}', space=vmem, size = 0x9000, scoped, tag = 'internal scratch']
  %s0 = inlined_call_operand.hbm [shape: u8[6,128,128], index: 0, kind: input, shape index: {}]
  %s1 = inlined_call_operand.hbm [shape: u8[6,128,128], index: 1, kind: output, shape index: {}]
  %s2 = sld [smem:[#allocation0]]
  $region41: #{tpu_custom_call.1} parent=0
    _
  %s4 = ssub.s32 1, %s2
  %s5 = scalar_select 0, %s4, %s2
  $region1: #{tpu_custom_call.1} parent=0
    #allocation2 [shape = 'u8[32768]{0}', space=vmem, size = 0x8000, scoped, tag = 'input window, operand 0']
    #allocation3 [shape = 's32[2]{0}', space=sflag, size = 0x8, scoped, tag = 'scoped memory for tpu_custom_call.1']
    #allocation4 [shape = 's32[2]{0}', space=sflag, size = 0x8, scoped, tag = 'scoped memory for tpu_custom_call.1']
    #allocation5 [shape = 'u8[32768]{0}', space=vmem, size = 0x8000, scoped, tag = 'output window, operand 0']
    %6 = vsyncpa [#allocation3], 0
    %s7 = scalar_lea.sflag [#allocation3], 1
    %8 = vsyncpa %s7, 0
    %9 = vsyncpa [#allocation4], 0
    %s10 = scalar_lea.sflag [#allocation4], 1
    %11 = vsyncpa %s10, 0
    loop: start=0, step=1, limit=8
    $region2: #{tpu_custom_call.1} parent=1 // loop_pre_header
      _
    $region3: #{tpu_custom_call.1} parent=1 // loop_header
      %s13 = sphi 0, %s17
      %p14 = scmp.ge.s32.totalorder %s13, 8
      %s20 = sphi 0, %s39
      %s21 = sphi 0, %s35
      %s22 = sphi 0, %s31
      %s23 = sphi 0, %s20
      %s24 = sphi 0, %s21
      %s25 = sphi 0, %s22
      %s26 = sphi 0, %s23
      %s27 = sphi 0, %s24
      %s28 = sphi 0, %s25
      %s46 = sphi 0, %s48
      %s49 = sphi 0, %s46
      %s50 = sphi 0, %s49
      %s66 = sphi 0, %s50
      %s76 = sphi 0, %s78
      %s79 = sphi 0, %s76
      %s80 = sphi 0, %s79
      %s96 = sphi 0, %s80
    $region4: #{tpu_custom_call.1} parent=1 // loop_header_branch
      %16 = sbr.rel (%p14) target = $region8
    $region5: #{tpu_custom_call.1} parent=1 // loop_body
      %s18 = ssub.s32 %s13, 1
      %s19 = ssub.s32 %s13, 2
      %s29 = sadd.s32 1, %s22
      %p30 = scmp.ge.s32.totalorder %s29, 1
      %s31 = scalar_select %p30, 0, %s29
      %s32 = sadd.s32 1, %s21
      %s33 = scalar_select %p30, %s32, %s21
      %p34 = scmp.ge.s32.totalorder %s33, 1
      %s35 = scalar_select %p34, 0, %s33
      %s36 = sadd.s32 1, %s20
      %s37 = scalar_select %p34, %s36, %s20
      %p38 = scmp.ge.s32.totalorder %s37, 6
      %s39 = scalar_select %p38, 0, %s37
      %s40 = ssub.s32 %s20, %s39
      %s41 = ssub.s32 %s21, %s35
      %s42 = sor.u32 %s40, %s41
      %s43 = ssub.s32 %s22, %s31
      %s44 = sor.u32 %s42, %s43
      %p45 = scmp.eq.s32.totalorder %s44, 0
      %s47 = sadd.s32 %s46, 1
      %s48 = scalar_select %p45, %s46, %s47
      %p51 = pneg %p45
      %p52 = scmp.eq.s32.totalorder %s13, 5
      %p53 = por %p51, %p52
      %p54 = scmp.ne.s32.totalorder %s46, %s49
      %p55 = scmp.eq.s32.totalorder %s13, 0
      %p56 = por %p54, %p55
      %p57 = scmp.ne.s32.totalorder %s46, %s49
      %p58 = scmp.eq.s32.totalorder %s18, 5
      %p59 = por %p57, %p58
      %p60 = scmp.ne.s32.totalorder %s49, %s50
      %p61 = scmp.eq.s32.totalorder %s18, 0
      %p62 = por %p60, %p61
      %p63 = scmp.ne.s32.totalorder %s49, %s50
      %p64 = scmp.eq.s32.totalorder %s19, 5
      %p65 = por %p63, %p64
      %p67 = scmp.ne.s32.totalorder %s50, %s66
      %p68 = scmp.eq.s32.totalorder %s19, 0
      %p69 = por %p67, %p68
      %s70 = ssub.s32 %s20, %s39
      %s71 = ssub.s32 %s21, %s35
      %s72 = sor.u32 %s70, %s71
      %s73 = ssub.s32 %s22, %s31
      %s74 = sor.u32 %s72, %s73
      %p75 = scmp.eq.s32.totalorder %s74, 0
      %s77 = sadd.s32 %s76, 1
      %s78 = scalar_select %p75, %s76, %s77
      %p81 = pneg %p75
      %p82 = scmp.eq.s32.totalorder %s13, 5
      %p83 = por %p81, %p82
      %p84 = scmp.ne.s32.totalorder %s76, %s79
      %p85 = scmp.eq.s32.totalorder %s13, 0
      %p86 = por %p84, %p85
      %p87 = scmp.ne.s32.totalorder %s76, %s79
      %p88 = scmp.eq.s32.totalorder %s18, 5
      %p89 = por %p87, %p88
      %p90 = scmp.ne.s32.totalorder %s79, %s80
      %p91 = scmp.eq.s32.totalorder %s18, 0
      %p92 = por %p90, %p91
      %p93 = scmp.ne.s32.totalorder %s79, %s80
      %p94 = scmp.eq.s32.totalorder %s19, 5
      %p95 = por %p93, %p94
      %p97 = scmp.ne.s32.totalorder %s80, %s96
      %p98 = scmp.eq.s32.totalorder %s19, 0
      %p99 = por %p97, %p98
      %p100 = scmp.le.s32.totalorder 1, %s13
      %p101 = scmp.lt.s32.totalorder %s13, 7
      %p102 = pnand %p100, %p101
      %p103 = pneg %p102
      // Predicated region
      $region9: #{tpu_custom_call.1} parent=5 // pred_check
        _
      $region10: #{tpu_custom_call.1} parent=5 // pred_check_branch
        %105 = sbr.rel (%p102) target = $region12
      $region11: #{tpu_custom_call.1} parent=5 // pred_region
        %s106 = ssub.s32 %s13, 1
      $region12: #{tpu_custom_call.1} parent=5 // pred_fallthru
        _
      %p107 = scmp.lt.s32.totalorder %s13, 6
      // Predicated region
      $region13: #{tpu_custom_call.1} parent=5 // pred_check
        %p108 = pneg %p107
      $region14: #{tpu_custom_call.1} parent=5 // pred_check_branch
        %110 = sbr.rel (%p108) target = $region16
      $region15: #{tpu_custom_call.1} parent=5 // pred_region
        // Predicated region
        $region17: #{tpu_custom_call.1} parent=15 // pred_check
          %p111 = pneg %p56
        $region18: #{tpu_custom_call.1} parent=15 // pred_check_branch
          %113 = sbr.rel (%p111) target = $region20
        $region19: #{tpu_custom_call.1} parent=15 // pred_region
          %s114 = sand.u32 %s46, 1
          %s115 = scalar_lea.sflag [#allocation3], %s114
          %s116 = sand.u32 %s46, 1
          %s117 = smul.addr %s116, 32
          %s118 = scalar_lea.vmem [#allocation2], %s117
          %s119 = smul.u32 4, %s21
          %121 = vsyncadd %s115, 0
          %s122 = sadd.s32 %s22, %s119
          %s123 = smul.addr %s20, 4
          %s124 = sadd.s32 %s122, %s123
          %s125 = smul.addr %s124, 8
          %s126 = scalar_lea.hbm %s0, %s125
          %s127 = sshll.u32 %s126, 4
          %s128 = int_to_ptr.hbm [resolvable:$true] %s127
          %s129 = sshll.u32 %s118, 4
          %s130 = int_to_ptr.vmem [resolvable:$true] %s129
          %135 = dma.hbm_to_vmem [thread:$0]  %s128, 512, %s130, %s115, 128, 128, 8
        $region20: #{tpu_custom_call.1} parent=15 // pred_fallthru
          _
      $region16: #{tpu_custom_call.1} parent=5 // pred_fallthru
        _
      %p136 = scmp.le.s32.totalorder 1, %s13
      %p137 = scmp.lt.s32.totalorder %s13, 7
      %p138 = pnand %p136, %p137
      %p139 = pneg %p138
      // Predicated region
      $region21: #{tpu_custom_call.1} parent=5 // pred_check
        _
      $region22: #{tpu_custom_call.1} parent=5 // pred_check_branch
        %141 = sbr.rel (%p138) target = $region24
      $region23: #{tpu_custom_call.1} parent=5 // pred_region
        %s142 = ssub.s32 %s13, 1
        %s143 = sand.u32 %s49, 1
        %s144 = scalar_lea.sflag [#allocation3], %s143
        %s145 = sand.u32 %s49, 1
        %s146 = smul.addr %s145, 32
        %s147 = scalar_lea.vmem [#allocation2], %s146
        // Predicated region
        $region25: #{tpu_custom_call.1} parent=23 // pred_check
          %p148 = pneg %p62
        $region26: #{tpu_custom_call.1} parent=23 // pred_check_branch
          %150 = sbr.rel (%p148) target = $region28
        $region27: #{tpu_custom_call.1} parent=23 // pred_region
          %152 = dma.done %s144, 512
        $region28: #{tpu_custom_call.1} parent=23 // pred_fallthru
          _
        %s153 = sand.u32 %s49, 1
        %s154 = scalar_lea.sflag [#allocation3], %s153
        %s155 = sand.u32 %s49, 1
        %s156 = smul.addr %s155, 32
        %s157 = scalar_lea.vmem [#allocation2], %s156
        %p158 = pneg %p62
        %p159 = pneg %p59
        %p160 = pneg %p92
        %p161 = pneg %p89
        %s162 = sand.u32 %s79, 1
        %s163 = scalar_lea.sflag [#allocation4], %s162
        %s164 = sand.u32 %s79, 1
        %s165 = smul.addr %s164, 32
        %s166 = scalar_lea.vmem [#allocation5], %s165
        %s167 = smul.u32 4, %s24
        %s168 = smul.u32 4, %s24
        %v169 = vld [vmem:[%s147] sm:$0xff]
        %v170 = vld [vmem:[%s147 + $0x8] sm:$0xff]
        %v171 = vld [vmem:[%s147 + $0x10] sm:$0xff]
        %v172 = vld [vmem:[%s147 + $0x18] sm:$0xff]
        %v173 = vunpack.c.0.s8 %v169
        %v174 = vunpack.c.1.s8 %v169
        %v175 = vunpack.c.2.s8 %v169
        %v176 = vunpack.c.3.s8 %v169
        %v177 = vunpack.c.0.s8 %v170
        %v178 = vunpack.c.1.s8 %v170
        %v179 = vunpack.c.2.s8 %v170
        %v180 = vunpack.c.3.s8 %v170
        %v181 = vunpack.c.0.s8 %v171
        %v182 = vunpack.c.1.s8 %v171
        %v183 = vunpack.c.2.s8 %v171
        %v184 = vunpack.c.3.s8 %v171
        %v185 = vunpack.c.0.s8 %v172
        %v186 = vunpack.c.1.s8 %v172
        %v187 = vunpack.c.2.s8 %v172
        %v188 = vunpack.c.3.s8 %v172
        %v189 = vand.u32 %v173, 255
        %v190 = vand.u32 %v174, 255
        %v191 = vand.u32 %v175, 255
        %v192 = vand.u32 %v176, 255
        %v193 = vand.u32 %v177, 255
        %v194 = vand.u32 %v178, 255
        %v195 = vand.u32 %v179, 255
        %v196 = vand.u32 %v180, 255
        %v197 = vand.u32 %v181, 255
        %v198 = vand.u32 %v182, 255
        %v199 = vand.u32 %v183, 255
        %v200 = vand.u32 %v184, 255
        %v201 = vand.u32 %v185, 255
        %v202 = vand.u32 %v186, 255
        %v203 = vand.u32 %v187, 255
        %v204 = vand.u32 %v188, 255
        %v205 = vcvt.s32.f32 %v189
        %v206 = vcvt.s32.f32 %v190
        %v207 = vcvt.s32.f32 %v191
        %v208 = vcvt.s32.f32 %v192
        %v209 = vcvt.s32.f32 %v193
        %v210 = vcvt.s32.f32 %v194
        %v211 = vcvt.s32.f32 %v195
        %v212 = vcvt.s32.f32 %v196
        %v213 = vcvt.s32.f32 %v197
        %v214 = vcvt.s32.f32 %v198
        %v215 = vcvt.s32.f32 %v199
        %v216 = vcvt.s32.f32 %v200
        %v217 = vcvt.s32.f32 %v201
        %v218 = vcvt.s32.f32 %v202
        %v219 = vcvt.s32.f32 %v203
        %v220 = vcvt.s32.f32 %v204
        %v221 = vpack.c.bf16 %v206, %v205
        %v222 = vpack.c.bf16 %v208, %v207
        %v223 = vpack.c.bf16 %v210, %v209
        %v224 = vpack.c.bf16 %v212, %v211
        %v225 = vpack.c.bf16 %v214, %v213
        %v226 = vpack.c.bf16 %v216, %v215
        %v227 = vpack.c.bf16 %v218, %v217
        %v228 = vpack.c.bf16 %v220, %v219
        %v229 = vlaneseq
        %v230 = vshrl.u32 %v229, 7
        %v231 = vadd.s32 %v230, 8
        %v232 = vadd.s32 %v230, 16
        %v233 = vadd.s32 %v230, 24
        %v234 = vadd.s32 %v230, 32
        %v235 = vadd.s32 %v230, 40
        %v236 = vadd.s32 %v230, 48
        %v237 = vadd.s32 %v230, 56
        %v238 = vadd.s32 %v230, 64
        %v239 = vadd.s32 %v230, 72
        %v240 = vadd.s32 %v230, 80
        %v241 = vadd.s32 %v230, 88
        %v242 = vadd.s32 %v230, 96
        %v243 = vadd.s32 %v230, 104
        %v244 = vadd.s32 %v230, 112
        %v245 = vadd.s32 %v230, 120
        %v246 = vcvt.s32.f32 %v230
        %v247 = vcvt.s32.f32 %v231
        %v248 = vcvt.s32.f32 %v232
        %v249 = vcvt.s32.f32 %v233
        %v250 = vcvt.s32.f32 %v234
        %v251 = vcvt.s32.f32 %v235
        %v252 = vcvt.s32.f32 %v236
        %v253 = vcvt.s32.f32 %v237
        %v254 = vcvt.s32.f32 %v238
        %v255 = vcvt.s32.f32 %v239
        %v256 = vcvt.s32.f32 %v240
        %v257 = vcvt.s32.f32 %v241
        %v258 = vcvt.s32.f32 %v242
        %v259 = vcvt.s32.f32 %v243
        %v260 = vcvt.s32.f32 %v244
        %v261 = vcvt.s32.f32 %v245
        %v262 = vlaneseq
        %v263 = vand.u32 %v262, 127
        %v264 = vcvt.s32.f32 %v263
        %v265 = vadd.f32 %v246, 0.5
        %v266 = vadd.f32 %v247, 0.5
        %v267 = vadd.f32 %v248, 0.5
        %v268 = vadd.f32 %v249, 0.5
        %v269 = vadd.f32 %v250, 0.5
        %v270 = vadd.f32 %v251, 0.5
        %v271 = vadd.f32 %v252, 0.5
        %v272 = vadd.f32 %v253, 0.5
        %v273 = vadd.f32 %v254, 0.5
        %v274 = vadd.f32 %v255, 0.5
        %v275 = vadd.f32 %v256, 0.5
        %v276 = vadd.f32 %v257, 0.5
        %v277 = vadd.f32 %v258, 0.5
        %v278 = vadd.f32 %v259, 0.5
        %v279 = vadd.f32 %v260, 0.5
        %v280 = vadd.f32 %v261, 0.5
        %v281 = vmul.f32 %v265, 0.25
        %v282 = vmul.f32 %v266, 0.25
        %v283 = vmul.f32 %v267, 0.25
        %v284 = vmul.f32 %v268, 0.25
        %v285 = vmul.f32 %v269, 0.25
        %v286 = vmul.f32 %v270, 0.25
        %v287 = vmul.f32 %v271, 0.25
        %v288 = vmul.f32 %v272, 0.25
        %v289 = vmul.f32 %v273, 0.25
        %v290 = vmul.f32 %v274, 0.25
        %v291 = vmul.f32 %v275, 0.25
        %v292 = vmul.f32 %v276, 0.25
        %v293 = vmul.f32 %v277, 0.25
        %v294 = vmul.f32 %v278, 0.25
        %v295 = vmul.f32 %v279, 0.25
        %v296 = vmul.f32 %v280, 0.25
        %v297 = vfloor.f32 %v281
        %v298 = vfloor.f32 %v282
        %v299 = vfloor.f32 %v283
        %v300 = vfloor.f32 %v284
        %v301 = vfloor.f32 %v285
        %v302 = vfloor.f32 %v286
        %v303 = vfloor.f32 %v287
        %v304 = vfloor.f32 %v288
        %v305 = vfloor.f32 %v289
        %v306 = vfloor.f32 %v290
        %v307 = vfloor.f32 %v291
        %v308 = vfloor.f32 %v292
        %v309 = vfloor.f32 %v293
        %v310 = vfloor.f32 %v294
        %v311 = vfloor.f32 %v295
        %v312 = vfloor.f32 %v296
        %v313 = vmul.f32 %v297, 4.0
        %v314 = vmul.f32 %v298, 4.0
        %v315 = vmul.f32 %v299, 4.0
        %v316 = vmul.f32 %v300, 4.0
        %v317 = vmul.f32 %v301, 4.0
        %v318 = vmul.f32 %v302, 4.0
        %v319 = vmul.f32 %v303, 4.0
        %v320 = vmul.f32 %v304, 4.0
        %v321 = vmul.f32 %v305, 4.0
        %v322 = vmul.f32 %v306, 4.0
        %v323 = vmul.f32 %v307, 4.0
        %v324 = vmul.f32 %v308, 4.0
        %v325 = vmul.f32 %v309, 4.0
        %v326 = vmul.f32 %v310, 4.0
        %v327 = vmul.f32 %v311, 4.0
        %v328 = vmul.f32 %v312, 4.0
        %v329 = vadd.f32 %v313, 2.0
        %v330 = vadd.f32 %v314, 2.0
        %v331 = vadd.f32 %v315, 2.0
        %v332 = vadd.f32 %v316, 2.0
        %v333 = vadd.f32 %v317, 2.0
        %v334 = vadd.f32 %v318, 2.0
        %v335 = vadd.f32 %v319, 2.0
        %v336 = vadd.f32 %v320, 2.0
        %v337 = vadd.f32 %v321, 2.0
        %v338 = vadd.f32 %v322, 2.0
        %v339 = vadd.f32 %v323, 2.0
        %v340 = vadd.f32 %v324, 2.0
        %v341 = vadd.f32 %v325, 2.0
        %v342 = vadd.f32 %v326, 2.0
        %v343 = vadd.f32 %v327, 2.0
        %v344 = vadd.f32 %v328, 2.0
        %vm345 = vcmp.eq.f32.partialorder %v264, %v329
        %vm346 = vcmp.eq.f32.partialorder %v264, %v330
        %vm347 = vcmp.eq.f32.partialorder %v264, %v331
        %vm348 = vcmp.eq.f32.partialorder %v264, %v332
        %vm349 = vcmp.eq.f32.partialorder %v264, %v333
        %vm350 = vcmp.eq.f32.partialorder %v264, %v334
        %vm351 = vcmp.eq.f32.partialorder %v264, %v335
        %vm352 = vcmp.eq.f32.partialorder %v264, %v336
        %vm353 = vcmp.eq.f32.partialorder %v264, %v337
        %vm354 = vcmp.eq.f32.partialorder %v264, %v338
        %vm355 = vcmp.eq.f32.partialorder %v264, %v339
        %vm356 = vcmp.eq.f32.partialorder %v264, %v340
        %vm357 = vcmp.eq.f32.partialorder %v264, %v341
        %vm358 = vcmp.eq.f32.partialorder %v264, %v342
        %vm359 = vcmp.eq.f32.partialorder %v264, %v343
        %vm360 = vcmp.eq.f32.partialorder %v264, %v344
        %v361 = vsel %vm345, 1.0, 0.0
        %v362 = vsel %vm346, 1.0, 0.0
        %v363 = vsel %vm347, 1.0, 0.0
        %v364 = vsel %vm348, 1.0, 0.0
        %v365 = vsel %vm349, 1.0, 0.0
        %v366 = vsel %vm350, 1.0, 0.0
        %v367 = vsel %vm351, 1.0, 0.0
        %v368 = vsel %vm352, 1.0, 0.0
        %v369 = vsel %vm353, 1.0, 0.0
        %v370 = vsel %vm354, 1.0, 0.0
        %v371 = vsel %vm355, 1.0, 0.0
        %v372 = vsel %vm356, 1.0, 0.0
        %v373 = vsel %vm357, 1.0, 0.0
        %v374 = vsel %vm358, 1.0, 0.0
        %v375 = vsel %vm359, 1.0, 0.0
        %v376 = vsel %vm360, 1.0, 0.0
        %v377 = vpack.c.bf16 %v362, %v361
        %v378 = vpack.c.bf16 %v364, %v363
        %v379 = vpack.c.bf16 %v366, %v365
        %v380 = vpack.c.bf16 %v368, %v367
        %v381 = vpack.c.bf16 %v370, %v369
        %v382 = vpack.c.bf16 %v372, %v371
        %v383 = vpack.c.bf16 %v374, %v373
        %v384 = vpack.c.bf16 %v376, %v375
        %v385 = vadd.f32 %v264, 0.5
        %v386 = vmul.f32 %v385, 0.25
        %v387 = vfloor.f32 %v386
        %v388 = vmul.f32 %v387, 4.0
        %v389 = vadd.f32 %v388, 2.0
        %vm390 = vcmp.eq.f32.partialorder %v246, %v389
        %vm391 = vcmp.eq.f32.partialorder %v247, %v389
        %vm392 = vcmp.eq.f32.partialorder %v248, %v389
        %vm393 = vcmp.eq.f32.partialorder %v249, %v389
        %vm394 = vcmp.eq.f32.partialorder %v250, %v389
        %vm395 = vcmp.eq.f32.partialorder %v251, %v389
        %vm396 = vcmp.eq.f32.partialorder %v252, %v389
        %vm397 = vcmp.eq.f32.partialorder %v253, %v389
        %vm398 = vcmp.eq.f32.partialorder %v254, %v389
        %vm399 = vcmp.eq.f32.partialorder %v255, %v389
        %vm400 = vcmp.eq.f32.partialorder %v256, %v389
        %vm401 = vcmp.eq.f32.partialorder %v257, %v389
        %vm402 = vcmp.eq.f32.partialorder %v258, %v389
        %vm403 = vcmp.eq.f32.partialorder %v259, %v389
        %vm404 = vcmp.eq.f32.partialorder %v260, %v389
        %vm405 = vcmp.eq.f32.partialorder %v261, %v389
        %v406 = vsel %vm390, 1.0, 0.0
        %v407 = vsel %vm391, 1.0, 0.0
        %v408 = vsel %vm392, 1.0, 0.0
        %v409 = vsel %vm393, 1.0, 0.0
        %v410 = vsel %vm394, 1.0, 0.0
        %v411 = vsel %vm395, 1.0, 0.0
        %v412 = vsel %vm396, 1.0, 0.0
        %v413 = vsel %vm397, 1.0, 0.0
        %v414 = vsel %vm398, 1.0, 0.0
        %v415 = vsel %vm399, 1.0, 0.0
        %v416 = vsel %vm400, 1.0, 0.0
        %v417 = vsel %vm401, 1.0, 0.0
        %v418 = vsel %vm402, 1.0, 0.0
        %v419 = vsel %vm403, 1.0, 0.0
        %v420 = vsel %vm404, 1.0, 0.0
        %v421 = vsel %vm405, 1.0, 0.0
        %v422 = vpack.c.bf16 %v407, %v406
        %v423 = vpack.c.bf16 %v409, %v408
        %v424 = vpack.c.bf16 %v411, %v410
        %v425 = vpack.c.bf16 %v413, %v412
        %v426 = vpack.c.bf16 %v415, %v414
        %v427 = vpack.c.bf16 %v417, %v416
        %v428 = vpack.c.bf16 %v419, %v418
        %v429 = vpack.c.bf16 %v421, %v420
        %430 = vmatpush.bf16.msra.mxu0 %v228
        %431 = vmatpush.bf16.msra.mxu0 %v227
        %432 = vmatpush.bf16.msra.mxu0 %v226
        %433 = vmatpush.bf16.msra.mxu0 %v225
        %434 = vmatpush.bf16.msra.mxu0 %v224
        %435 = vmatpush.bf16.msra.mxu0 %v223
        %436 = vmatpush.bf16.msra.mxu0 %v222
        %437 = vmatpush.bf16.msra.mxu0 %v221
        %438 = vmatmul.bf16.gmra.mxu0 %v377
        %v439 = vpop.f32.mrf.mxu0
        %v440 = vadd.f32 0.0, %v439
        %v441 = vpop.f32.mrf.mxu0
        %v442 = vadd.f32 0.0, %v441
        %443 = vmatmul.bf16.gmra.mxu0 %v378
        %v444 = vpop.f32.mrf.mxu0
        %v445 = vadd.f32 0.0, %v444
        %v446 = vpop.f32.mrf.mxu0
        %v447 = vadd.f32 0.0, %v446
        %448 = vmatmul.bf16.gmra.mxu0 %v379
        %v449 = vpop.f32.mrf.mxu0
        %v450 = vadd.f32 0.0, %v449
        %v451 = vpop.f32.mrf.mxu0
        %v452 = vadd.f32 0.0, %v451
        %453 = vmatmul.bf16.gmra.mxu0 %v380
        %v454 = vpop.f32.mrf.mxu0
        %v455 = vadd.f32 0.0, %v454
        %v456 = vpop.f32.mrf.mxu0
        %v457 = vadd.f32 0.0, %v456
        %458 = vmatmul.bf16.gmra.mxu0 %v381
        %v459 = vpop.f32.mrf.mxu0
        %v460 = vadd.f32 0.0, %v459
        %v461 = vpop.f32.mrf.mxu0
        %v462 = vadd.f32 0.0, %v461
        %463 = vmatmul.bf16.gmra.mxu0 %v382
        %v464 = vpop.f32.mrf.mxu0
        %v465 = vadd.f32 0.0, %v464
        %v466 = vpop.f32.mrf.mxu0
        %v467 = vadd.f32 0.0, %v466
        %468 = vmatmul.bf16.gmra.mxu0 %v383
        %v469 = vpop.f32.mrf.mxu0
        %v470 = vadd.f32 0.0, %v469
        %v471 = vpop.f32.mrf.mxu0
        %v472 = vadd.f32 0.0, %v471
        %473 = vmatmul.bf16.gmra.mxu0 %v384
        %v474 = vpop.f32.mrf.mxu0
        %v475 = vadd.f32 0.0, %v474
        %v476 = vpop.f32.mrf.mxu0
        %v477 = vadd.f32 0.0, %v476
        %478 = vdwg.mxu0
        %v479 = vpack.c.bf16 %v442, %v440
        %v480 = vpack.c.bf16 %v447, %v445
        %v481 = vpack.c.bf16 %v452, %v450
        %v482 = vpack.c.bf16 %v457, %v455
        %v483 = vpack.c.bf16 %v462, %v460
        %v484 = vpack.c.bf16 %v467, %v465
        %v485 = vpack.c.bf16 %v472, %v470
        %v486 = vpack.c.bf16 %v477, %v475
        %487 = vmatpush.bf16.msra.mxu0 %v429
        %488 = vmatpush.bf16.msra.mxu0 %v428
        %489 = vmatpush.bf16.msra.mxu0 %v427
        %490 = vmatpush.bf16.msra.mxu0 %v426
        %491 = vmatpush.bf16.msra.mxu0 %v425
        %492 = vmatpush.bf16.msra.mxu0 %v424
        %493 = vmatpush.bf16.msra.mxu0 %v423
        %494 = vmatpush.bf16.msra.mxu0 %v422
        %495 = vmatmul.bf16.gmra.mxu0 %v479
        %v496 = vpop.f32.mrf.mxu0
        %v497 = vadd.f32 0.0, %v496
        %v498 = vpop.f32.mrf.mxu0
        %v499 = vadd.f32 0.0, %v498
        %500 = vmatmul.bf16.gmra.mxu0 %v480
        %v501 = vpop.f32.mrf.mxu0
        %v502 = vadd.f32 0.0, %v501
        %v503 = vpop.f32.mrf.mxu0
        %v504 = vadd.f32 0.0, %v503
        %505 = vmatmul.bf16.gmra.mxu0 %v481
        %v506 = vpop.f32.mrf.mxu0
        %v507 = vadd.f32 0.0, %v506
        %v508 = vpop.f32.mrf.mxu0
        %v509 = vadd.f32 0.0, %v508
        %510 = vmatmul.bf16.gmra.mxu0 %v482
        %v511 = vpop.f32.mrf.mxu0
        %v512 = vadd.f32 0.0, %v511
        %v513 = vpop.f32.mrf.mxu0
        %v514 = vadd.f32 0.0, %v513
        %515 = vmatmul.bf16.gmra.mxu0 %v483
        %v516 = vpop.f32.mrf.mxu0
        %v517 = vadd.f32 0.0, %v516
        %v518 = vpop.f32.mrf.mxu0
        %v519 = vadd.f32 0.0, %v518
        %520 = vmatmul.bf16.gmra.mxu0 %v484
        %v521 = vpop.f32.mrf.mxu0
        %v522 = vadd.f32 0.0, %v521
        %v523 = vpop.f32.mrf.mxu0
        %v524 = vadd.f32 0.0, %v523
        %525 = vmatmul.bf16.gmra.mxu0 %v485
        %v526 = vpop.f32.mrf.mxu0
        %v527 = vadd.f32 0.0, %v526
        %v528 = vpop.f32.mrf.mxu0
        %v529 = vadd.f32 0.0, %v528
        %530 = vmatmul.bf16.gmra.mxu0 %v486
        %v531 = vpop.f32.mrf.mxu0
        %v532 = vadd.f32 0.0, %v531
        %v533 = vpop.f32.mrf.mxu0
        %v534 = vadd.f32 0.0, %v533
        %535 = vdwg.mxu0
        %v536 = vround.ne.pseudo %v497
        %v537 = vround.ne.pseudo %v499
        %v538 = vround.ne.pseudo %v502
        %v539 = vround.ne.pseudo %v504
        %v540 = vround.ne.pseudo %v507
        %v541 = vround.ne.pseudo %v509
        %v542 = vround.ne.pseudo %v512
        %v543 = vround.ne.pseudo %v514
        %v544 = vround.ne.pseudo %v517
        %v545 = vround.ne.pseudo %v519
        %v546 = vround.ne.pseudo %v522
        %v547 = vround.ne.pseudo %v524
        %v548 = vround.ne.pseudo %v527
        %v549 = vround.ne.pseudo %v529
        %v550 = vround.ne.pseudo %v532
        %v551 = vround.ne.pseudo %v534
        %v552 = vmax.f32 %v536, 0.0
        %v553 = vmax.f32 %v537, 0.0
        %v554 = vmax.f32 %v538, 0.0
        %v555 = vmax.f32 %v539, 0.0
        %v556 = vmax.f32 %v540, 0.0
        %v557 = vmax.f32 %v541, 0.0
        %v558 = vmax.f32 %v542, 0.0
        %v559 = vmax.f32 %v543, 0.0
        %v560 = vmax.f32 %v544, 0.0
        %v561 = vmax.f32 %v545, 0.0
        %v562 = vmax.f32 %v546, 0.0
        %v563 = vmax.f32 %v547, 0.0
        %v564 = vmax.f32 %v548, 0.0
        %v565 = vmax.f32 %v549, 0.0
        %v566 = vmax.f32 %v550, 0.0
        %v567 = vmax.f32 %v551, 0.0
        %v568 = vmin.f32 %v552, 255.0
        %v569 = vmin.f32 %v553, 255.0
        %v570 = vmin.f32 %v554, 255.0
        %v571 = vmin.f32 %v555, 255.0
        %v572 = vmin.f32 %v556, 255.0
        %v573 = vmin.f32 %v557, 255.0
        %v574 = vmin.f32 %v558, 255.0
        %v575 = vmin.f32 %v559, 255.0
        %v576 = vmin.f32 %v560, 255.0
        %v577 = vmin.f32 %v561, 255.0
        %v578 = vmin.f32 %v562, 255.0
        %v579 = vmin.f32 %v563, 255.0
        %v580 = vmin.f32 %v564, 255.0
        %v581 = vmin.f32 %v565, 255.0
        %v582 = vmin.f32 %v566, 255.0
        %v583 = vmin.f32 %v567, 255.0
        %v584 = vcvt.f32.s32.to.zero.pseudo %v568
        %v585 = vcvt.f32.s32.to.zero.pseudo %v569
        %v586 = vcvt.f32.s32.to.zero.pseudo %v570
        %v587 = vcvt.f32.s32.to.zero.pseudo %v571
        %v588 = vcvt.f32.s32.to.zero.pseudo %v572
        %v589 = vcvt.f32.s32.to.zero.pseudo %v573
        %v590 = vcvt.f32.s32.to.zero.pseudo %v574
        %v591 = vcvt.f32.s32.to.zero.pseudo %v575
        %v592 = vcvt.f32.s32.to.zero.pseudo %v576
        %v593 = vcvt.f32.s32.to.zero.pseudo %v577
        %v594 = vcvt.f32.s32.to.zero.pseudo %v578
        %v595 = vcvt.f32.s32.to.zero.pseudo %v579
        %v596 = vcvt.f32.s32.to.zero.pseudo %v580
        %v597 = vcvt.f32.s32.to.zero.pseudo %v581
        %v598 = vcvt.f32.s32.to.zero.pseudo %v582
        %v599 = vcvt.f32.s32.to.zero.pseudo %v583
        %v600 = vpack.c.b16 %v585, %v584
        %v601 = vpack.c.b16 %v587, %v586
        %v602 = vpack.c.b8 %v601, %v600
        %v603 = vpack.c.b16 %v589, %v588
        %v604 = vpack.c.b16 %v591, %v590
        %v605 = vpack.c.b8 %v604, %v603
        %v606 = vpack.c.b16 %v593, %v592
        %v607 = vpack.c.b16 %v595, %v594
        %v608 = vpack.c.b8 %v607, %v606
        %v609 = vpack.c.b16 %v597, %v596
        %v610 = vpack.c.b16 %v599, %v598
        %v611 = vpack.c.b8 %v610, %v609
        %612 = vst [vmem:[%s166] sm:$0xff] %v602
        %613 = vst [vmem:[%s166 + $0x8] sm:$0xff] %v605
        %614 = vst [vmem:[%s166 + $0x10] sm:$0xff] %v608
        %615 = vst [vmem:[%s166 + $0x18] sm:$0xff] %v611
        %s616 = sand.u32 %s79, 1
        %s617 = scalar_lea.sflag [#allocation4], %s616
        %s618 = sand.u32 %s79, 1
        %s619 = smul.addr %s618, 32
        %s620 = scalar_lea.vmem [#allocation5], %s619
        // Predicated region
        $region29: #{tpu_custom_call.1} parent=23 // pred_check
          %p621 = pneg %p89
        $region30: #{tpu_custom_call.1} parent=23 // pred_check_branch
          %623 = sbr.rel (%p621) target = $region32
        $region31: #{tpu_custom_call.1} parent=23 // pred_region
          %s624 = smul.u32 4, %s24
          %626 = vsyncadd %s617, 0
          %s627 = sadd.s32 %s25, %s624
          %s628 = smul.addr %s23, 4
          %s629 = sadd.s32 %s627, %s628
          %s630 = smul.addr %s629, 8
          %s631 = scalar_lea.hbm %s1, %s630
          %s632 = sshll.u32 %s620, 4
          %s633 = int_to_ptr.vmem [resolvable:$true] %s632
          %s634 = sshll.u32 %s631, 4
          %s635 = int_to_ptr.hbm [resolvable:$true] %s634
          %640 = dma.vmem_to_hbm [thread:$0]  %s633, 512, %s635, %s617, 128, 128, 8
        $region32: #{tpu_custom_call.1} parent=23 // pred_fallthru
          _
      $region24: #{tpu_custom_call.1} parent=5 // pred_fallthru
        _
      %p641 = scmp.le.s32.totalorder 2, %s13
      // Predicated region
      $region33: #{tpu_custom_call.1} parent=5 // pred_check
        %p642 = pneg %p641
      $region34: #{tpu_custom_call.1} parent=5 // pred_check_branch
        %644 = sbr.rel (%p642) target = $region36
      $region35: #{tpu_custom_call.1} parent=5 // pred_region
        %s645 = ssub.s32 %s13, 2
        // Predicated region
        $region37: #{tpu_custom_call.1} parent=35 // pred_check
          %p646 = pneg %p95
        $region38: #{tpu_custom_call.1} parent=35 // pred_check_branch
          %648 = sbr.rel (%p646) target = $region40
        $region39: #{tpu_custom_call.1} parent=35 // pred_region
          %s649 = sand.u32 %s80, 1
          %s650 = scalar_lea.sflag [#allocation4], %s649
          %s651 = sand.u32 %s80, 1
          %s652 = smul.addr %s651, 32
          %s653 = scalar_lea.vmem [#allocation5], %s652
          %655 = dma.done %s650, 512
        $region40: #{tpu_custom_call.1} parent=35 // pred_fallthru
          _
      $region36: #{tpu_custom_call.1} parent=5 // pred_fallthru
        _
    $region6: #{tpu_custom_call.1} parent=1 // loop_footer
      %s17 = sadd.s32 1, %s13
    $region7: #{tpu_custom_call.1} parent=1 // loop_footer_branch
      %12 = sbr.rel target = $region3
    $region8: #{tpu_custom_call.1} parent=1 // loop_exit
      _
    %656 = vsyncpa [#allocation3], 1
    %s657 = scalar_lea.sflag [#allocation3], 1
    %658 = vsyncpa %s657, 1
    %659 = vsyncpa [#allocation4], 1
    %s660 = scalar_lea.sflag [#allocation4], 1
    %661 = vsyncpa %s660, 1

</llo_original>
